<compile_context>
chip_gen: v7x
topology: tpu7x:2x2x1
jax: 0.10.0
libtpu: 0.0.40
codegen_flags: <defaults>
</compile_context>

<pallas_src>
import math

import jax
import jax.numpy as jnp
from jax import lax
from jax.experimental import pallas as pl
from jax.experimental.pallas import tpu as pltpu

TEMPERATURE = 0.5
AUTO_IOU = 0.5
BN_EPS = 1e-5        # nn.BatchNorm1d default eps
NORM_EPS = 1e-12     # F.normalize default eps

INV_SQRT_T = 1.0 / math.sqrt(TEMPERATURE)   # folded into the L2 normalization
DIAG_CONST = math.exp(1.0 / TEMPERATURE)    # exp(oc_i . oc_i) for unit-norm rows
A2_CONST = math.exp(1.0 - AUTO_IOU)         # mid-band modulating weight


def ucl_kernel(x1_ref, x2_ref, w1_ref, w2_ref, p_ref, o_ref):
    # stacked small params: rows = b1, gamma, beta, b2 (each (1, D))
    b1 = p_ref[0:1, :]
    gamma = p_ref[1:2, :]
    beta = p_ref[2:3, :]
    b2 = p_ref[3:4, :]

    # bf16 operands for the MXU; everything elementwise stays f32.
    w1b = w1_ref[...].astype(jnp.bfloat16)
    w2b = w2_ref[...].astype(jnp.bfloat16)

    n = x1_ref.shape[0]
    inv_n = 1.0 / float(n)
    inv_2n = 0.5 * inv_n

    def project_normalize(x_ref):
        # Linear(in_fea, D) -> BatchNorm1d (training-mode batch stats, biased
        # var, no running-stat update) -> ReLU -> Linear(D, D)
        h = jnp.dot(x_ref[...].astype(jnp.bfloat16), w1b,
                    preferred_element_type=jnp.float32) + b1           # (N, D) f32
        mean = jnp.sum(h, axis=0, keepdims=True) * inv_n               # single pass
        mean_sq = jnp.sum(h * h, axis=0, keepdims=True) * inv_n
        var = mean_sq - mean * mean
        hn = (h - mean) * lax.rsqrt(var + BN_EPS) * gamma + beta
        hr = jnp.maximum(hn, 0.0)
        out = jnp.dot(hr.astype(jnp.bfloat16), w2b,
                      preferred_element_type=jnp.float32) + b2         # (N, D) f32
        # fused L2 row-normalize with 1/sqrt(T) folded in: ||row||^2 == 1/T
        sumsq = jnp.sum(out * out, axis=1, keepdims=True)
        inv = lax.rsqrt(jnp.maximum(sumsq, NORM_EPS * NORM_EPS)) * INV_SQRT_T
        return out * inv                                               # (N, D) f32

    oc1 = project_normalize(x1_ref)
    oc2 = project_normalize(x2_ref)

    # gram blocks in f32 so the constant-diagonal subtraction stays exact.
    def gram(a, b):  # a @ b.T
        return lax.dot_general(a, b, (((1,), (1,)), ((), ())),
                               preferred_element_type=jnp.float32)

    s11 = jnp.exp(gram(oc1, oc1))                                      # (N, N)
    s12 = jnp.exp(gram(oc1, oc2))
    s21 = jnp.exp(gram(oc2, oc1))
    s22 = jnp.exp(gram(oc2, oc2))

    # off-diagonal row sums of exp(sim/T); diagonal is exp(1/T) for unit rows.
    denom1 = (jnp.sum(s11, axis=1, keepdims=True)
              + jnp.sum(s12, axis=1, keepdims=True) - DIAG_CONST)      # (N, 1)
    denom2 = (jnp.sum(s21, axis=1, keepdims=True)
              + jnp.sum(s22, axis=1, keepdims=True) - DIAG_CONST)      # (N, 1)

    # positive pairs (already carry the 1/T scale)
    pos = jnp.exp(jnp.sum(oc1 * oc2, axis=1, keepdims=True))           # (N, 1)

    # modulating weights
    m1 = (pos <= AUTO_IOU - 0.1).astype(jnp.float32)
    m2 = ((pos > AUTO_IOU - 0.1) & (pos < AUTO_IOU)).astype(jnp.float32)
    m3 = (pos >= AUTO_IOU).astype(jnp.float32)
    mw = m1 + m2 * A2_CONST + m3 * jnp.exp(1.0 - pos)                  # (N, 1)

    # mean over 2N rows; rows i and i+N share pos_i and mw_i
    lv = mw * (-jnp.log(pos / denom1) - jnp.log(pos / denom2))         # (N, 1)
    o_ref[...] = jnp.sum(lv, axis=0, keepdims=True) * inv_2n           # (1, 1)


def ucl_loss(doc_fea, doc_fea_svd, w1, b1, gamma, beta, w2, b2):
    # Only the tiny (4, D) parameter stack is consolidated outside the kernel;
    # the activations go in as-is (no extra HBM round-trip).
    params = jnp.concatenate([b1, gamma, beta, b2], axis=0)
    vmem = pl.BlockSpec(memory_space=pltpu.MemorySpace.VMEM)
    out = pl.pallas_call(
        ucl_kernel,
        out_shape=jax.ShapeDtypeStruct((1, 1), jnp.float32),
        in_specs=[vmem] * 5,
        out_specs=vmem,
    )(doc_fea, doc_fea_svd, w1, w2, params)
    return out[0, 0]


# ---------------------------------------------------------------------------
# Pure-JAX references mirroring the PyTorch forward. `matmul_dtype` lets us
# validate the kernel tightly against a mixed-precision (bf16-MXU) reference
# and loosely against the pure-f32 reference.
# ---------------------------------------------------------------------------
def _projector_ref(a, w1, b1, gamma, beta, w2, b2, matmul_dtype):
    h = jnp.dot(a.astype(matmul_dtype), w1.astype(matmul_dtype),
                preferred_element_type=jnp.float32) + b1
    m = jnp.mean(h, axis=0, keepdims=True)
    v = jnp.mean((h - m) ** 2, axis=0, keepdims=True)
    h = (h - m) / jnp.sqrt(v + BN_EPS) * gamma + beta
    h = jnp.maximum(h, 0.0)
    return jnp.dot(h.astype(matmul_dtype), w2.astype(matmul_dtype),
                   preferred_element_type=jnp.float32) + b2


def ucl_reference(doc_fea, doc_fea_svd, w1, b1, gamma, beta, w2, b2,
                  matmul_dtype=jnp.float32):
    def l2n(a):
        nrm = jnp.sqrt(jnp.sum(a * a, axis=1, keepdims=True))
        return a / jnp.maximum(nrm, NORM_EPS)

    out1 = l2n(_projector_ref(doc_fea, w1, b1, gamma, beta, w2, b2, matmul_dtype))
    out2 = l2n(_projector_ref(doc_fea_svd, w1, b1, gamma, beta, w2, b2, matmul_dtype))
    oc = jnp.concatenate([out1, out2], axis=0)
    sim = jnp.exp(oc @ oc.T / TEMPERATURE)
    denom = jnp.sum(sim, axis=1) - jnp.diag(sim)
    pos = jnp.exp(jnp.sum(out1 * out2, axis=1) / TEMPERATURE)
    pos = jnp.concatenate([pos, pos], axis=0)
    c1 = (pos <= AUTO_IOU - 0.1).astype(jnp.float32)
    c2 = ((pos > AUTO_IOU - 0.1) & (pos < AUTO_IOU)).astype(jnp.float32)
    c3 = (pos >= AUTO_IOU).astype(jnp.float32)
    mw = c1 + c2 * jnp.exp(1.0 - AUTO_IOU) + c3 * jnp.exp(-pos + 1.0)
    return jnp.mean(-jnp.log(pos / denom) * mw)


if __name__ == "__main__":
    N, IN_FEA, OUT_FEA = 8, 32, 32

    key = jax.random.PRNGKey(0)
    kx, ks, kw1, kb1, kw2, kb2 = jax.random.split(key, 6)

    doc_fea = jax.random.normal(kx, (N, IN_FEA), dtype=jnp.float32)
    doc_fea_svd = jax.random.normal(ks, (N, IN_FEA), dtype=jnp.float32)

    # deterministic synthetic parameters (PyTorch-like scale).
    # w1/w2 are stored as (in, out) so the kernel computes x @ W + b.
    bound1 = 1.0 / IN_FEA ** 0.5
    bound2 = 1.0 / OUT_FEA ** 0.5
    w1 = jax.random.uniform(kw1, (IN_FEA, OUT_FEA), jnp.float32, -bound1, bound1)
    b1 = jax.random.uniform(kb1, (1, OUT_FEA), jnp.float32, -bound1, bound1)
    gamma = jnp.ones((1, OUT_FEA), jnp.float32)   # BatchNorm1d default init
    beta = jnp.zeros((1, OUT_FEA), jnp.float32)
    w2 = jax.random.uniform(kw2, (OUT_FEA, OUT_FEA), jnp.float32, -bound2, bound2)
    b2 = jax.random.uniform(kb2, (1, OUT_FEA), jnp.float32, -bound2, bound2)

    loss = jax.block_until_ready(
        ucl_loss(doc_fea, doc_fea_svd, w1, b1, gamma, beta, w2, b2))

    # Tight check against a mixed-precision reference that uses the same bf16
    # MXU operands as the kernel (validates kernel math).
    ref_mixed = jax.block_until_ready(
        ucl_reference(doc_fea, doc_fea_svd, w1, b1, gamma, beta, w2, b2,
                      matmul_dtype=jnp.bfloat16))
    # Loose check against the pure-f32 reference (documents the bf16-MXU
    # precision cost requested by the review).
    ref_f32 = jax.block_until_ready(
        ucl_reference(doc_fea, doc_fea_svd, w1, b1, gamma, beta, w2, b2,
                      matmul_dtype=jnp.float32))

    assert jnp.isfinite(loss), "loss is not finite"
    assert jnp.allclose(loss, ref_mixed, rtol=2e-3, atol=2e-4), (loss, ref_mixed)
    assert jnp.allclose(loss, ref_f32, rtol=5e-2, atol=1e-2), (loss, ref_f32)
    print("KERNEL_OK")
</pallas_src>

<mosaic_0001>
module attributes {stable_mosaic.version = 11 : i64} {
  func.func @ucl_kernel(%arg0: memref<8x32xf32, #tpu.memory_space<vmem>>, %arg1: memref<8x32xf32, #tpu.memory_space<vmem>>, %arg2: memref<32x32xf32, #tpu.memory_space<vmem>>, %arg3: memref<32x32xf32, #tpu.memory_space<vmem>>, %arg4: memref<4x32xf32, #tpu.memory_space<vmem>>, %arg5: memref<1x1xf32, #tpu.memory_space<vmem>>) attributes {dimension_semantics = [], scalar_prefetch = 0 : i64, scratch_operands = 0 : i64, tpu.core_type = #tpu.core_type<tc>} {
    %c0 = arith.constant 0 : index
    %c0_0 = arith.constant 0 : index
    %0 = vector.load %arg4[%c0, %c0_0] : memref<4x32xf32, #tpu.memory_space<vmem>>, vector<1x32xf32>
    %c1 = arith.constant 1 : index
    %c0_1 = arith.constant 0 : index
    %1 = vector.load %arg4[%c1, %c0_1] : memref<4x32xf32, #tpu.memory_space<vmem>>, vector<1x32xf32>
    %c2 = arith.constant 2 : index
    %c0_2 = arith.constant 0 : index
    %2 = vector.load %arg4[%c2, %c0_2] : memref<4x32xf32, #tpu.memory_space<vmem>>, vector<1x32xf32>
    %c3 = arith.constant 3 : index
    %c0_3 = arith.constant 0 : index
    %3 = vector.load %arg4[%c3, %c0_3] : memref<4x32xf32, #tpu.memory_space<vmem>>, vector<1x32xf32>
    %c0_4 = arith.constant 0 : index
    %c0_5 = arith.constant 0 : index
    %4 = vector.load %arg2[%c0_4, %c0_5] : memref<32x32xf32, #tpu.memory_space<vmem>>, vector<32x32xf32>
    %5 = arith.truncf %4 : vector<32x32xf32> to vector<32x32xbf16>
    %c0_6 = arith.constant 0 : index
    %c0_7 = arith.constant 0 : index
    %6 = vector.load %arg3[%c0_6, %c0_7] : memref<32x32xf32, #tpu.memory_space<vmem>>, vector<32x32xf32>
    %7 = arith.truncf %6 : vector<32x32xf32> to vector<32x32xbf16>
    %c0_8 = arith.constant 0 : index
    %c0_9 = arith.constant 0 : index
    %8 = vector.load %arg0[%c0_8, %c0_9] : memref<8x32xf32, #tpu.memory_space<vmem>>, vector<8x32xf32>
    %9 = arith.truncf %8 : vector<8x32xf32> to vector<8x32xbf16>
    %cst = arith.constant dense<0.000000e+00> : vector<8x32xf32>
    %10 = tpu.matmul %9, %5, %cst {dimension_numbers = #tpu.dot_dimension_numbers<[1], [0], [0], [1], [0, 0, 1, 1], [], []>} : vector<8x32xbf16>, vector<32x32xbf16>, vector<8x32xf32> -> vector<8x32xf32>
    %11 = vector.broadcast %0 : vector<1x32xf32> to vector<8x32xf32>
    %12 = arith.addf %10, %11 : vector<8x32xf32>
    %cst_10 = arith.constant dense<0.000000e+00> : vector<32xf32>
    %13 = vector.multi_reduction <add>, %12, %cst_10 [0] : vector<8x32xf32> to vector<32xf32>
    %14 = vector.shape_cast %13 : vector<32xf32> to vector<1x32xf32>
    %cst_11 = arith.constant 1.250000e-01 : f32
    %15 = vector.broadcast %cst_11 : f32 to vector<1x32xf32>
    %16 = arith.mulf %14, %15 : vector<1x32xf32>
    %17 = arith.mulf %12, %12 : vector<8x32xf32>
    %cst_12 = arith.constant dense<0.000000e+00> : vector<32xf32>
    %18 = vector.multi_reduction <add>, %17, %cst_12 [0] : vector<8x32xf32> to vector<32xf32>
    %19 = vector.shape_cast %18 : vector<32xf32> to vector<1x32xf32>
    %cst_13 = arith.constant 1.250000e-01 : f32
    %20 = vector.broadcast %cst_13 : f32 to vector<1x32xf32>
    %21 = arith.mulf %19, %20 : vector<1x32xf32>
    %22 = arith.mulf %16, %16 : vector<1x32xf32>
    %23 = arith.subf %21, %22 : vector<1x32xf32>
    %24 = vector.broadcast %16 : vector<1x32xf32> to vector<8x32xf32>
    %25 = arith.subf %12, %24 : vector<8x32xf32>
    %cst_14 = arith.constant 9.99999974E-6 : f32
    %26 = vector.broadcast %cst_14 : f32 to vector<1x32xf32>
    %27 = arith.addf %23, %26 : vector<1x32xf32>
    %28 = math.rsqrt %27 : vector<1x32xf32>
    %29 = vector.broadcast %28 : vector<1x32xf32> to vector<8x32xf32>
    %30 = arith.mulf %25, %29 : vector<8x32xf32>
    %31 = vector.broadcast %1 : vector<1x32xf32> to vector<8x32xf32>
    %32 = arith.mulf %30, %31 : vector<8x32xf32>
    %33 = vector.broadcast %2 : vector<1x32xf32> to vector<8x32xf32>
    %34 = arith.addf %32, %33 : vector<8x32xf32>
    %cst_15 = arith.constant 0.000000e+00 : f32
    %35 = vector.broadcast %cst_15 : f32 to vector<8x32xf32>
    %36 = arith.maximumf %34, %35 : vector<8x32xf32>
    %37 = arith.truncf %36 : vector<8x32xf32> to vector<8x32xbf16>
    %cst_16 = arith.constant dense<0.000000e+00> : vector<8x32xf32>
    %38 = tpu.matmul %37, %7, %cst_16 {dimension_numbers = #tpu.dot_dimension_numbers<[1], [0], [0], [1], [0, 0, 1, 1], [], []>} : vector<8x32xbf16>, vector<32x32xbf16>, vector<8x32xf32> -> vector<8x32xf32>
    %39 = vector.broadcast %3 : vector<1x32xf32> to vector<8x32xf32>
    %40 = arith.addf %38, %39 : vector<8x32xf32>
    %41 = arith.mulf %40, %40 : vector<8x32xf32>
    %cst_17 = arith.constant dense<0.000000e+00> : vector<8xf32>
    %42 = vector.multi_reduction <add>, %41, %cst_17 [1] : vector<8x32xf32> to vector<8xf32>
    %43 = vector.shape_cast %42 : vector<8xf32> to vector<8x1xf32>
    %cst_18 = arith.constant 1.000000e-24 : f32
    %44 = vector.broadcast %cst_18 : f32 to vector<8x1xf32>
    %45 = arith.maximumf %43, %44 : vector<8x1xf32>
    %46 = math.rsqrt %45 : vector<8x1xf32>
    %cst_19 = arith.constant 1.41421354 : f32
    %47 = vector.broadcast %cst_19 : f32 to vector<8x1xf32>
    %48 = arith.mulf %46, %47 : vector<8x1xf32>
    %49 = vector.broadcast %48 : vector<8x1xf32> to vector<8x32xf32>
    %50 = arith.mulf %40, %49 : vector<8x32xf32>
    %c0_20 = arith.constant 0 : index
    %c0_21 = arith.constant 0 : index
    %51 = vector.load %arg1[%c0_20, %c0_21] : memref<8x32xf32, #tpu.memory_space<vmem>>, vector<8x32xf32>
    %52 = arith.truncf %51 : vector<8x32xf32> to vector<8x32xbf16>
    %cst_22 = arith.constant dense<0.000000e+00> : vector<8x32xf32>
    %53 = tpu.matmul %52, %5, %cst_22 {dimension_numbers = #tpu.dot_dimension_numbers<[1], [0], [0], [1], [0, 0, 1, 1], [], []>} : vector<8x32xbf16>, vector<32x32xbf16>, vector<8x32xf32> -> vector<8x32xf32>
    %54 = vector.broadcast %0 : vector<1x32xf32> to vector<8x32xf32>
    %55 = arith.addf %53, %54 : vector<8x32xf32>
    %cst_23 = arith.constant dense<0.000000e+00> : vector<32xf32>
    %56 = vector.multi_reduction <add>, %55, %cst_23 [0] : vector<8x32xf32> to vector<32xf32>
    %57 = vector.shape_cast %56 : vector<32xf32> to vector<1x32xf32>
    %cst_24 = arith.constant 1.250000e-01 : f32
    %58 = vector.broadcast %cst_24 : f32 to vector<1x32xf32>
    %59 = arith.mulf %57, %58 : vector<1x32xf32>
    %60 = arith.mulf %55, %55 : vector<8x32xf32>
    %cst_25 = arith.constant dense<0.000000e+00> : vector<32xf32>
    %61 = vector.multi_reduction <add>, %60, %cst_25 [0] : vector<8x32xf32> to vector<32xf32>
    %62 = vector.shape_cast %61 : vector<32xf32> to vector<1x32xf32>
    %cst_26 = arith.constant 1.250000e-01 : f32
    %63 = vector.broadcast %cst_26 : f32 to vector<1x32xf32>
    %64 = arith.mulf %62, %63 : vector<1x32xf32>
    %65 = arith.mulf %59, %59 : vector<1x32xf32>
    %66 = arith.subf %64, %65 : vector<1x32xf32>
    %67 = vector.broadcast %59 : vector<1x32xf32> to vector<8x32xf32>
    %68 = arith.subf %55, %67 : vector<8x32xf32>
    %cst_27 = arith.constant 9.99999974E-6 : f32
    %69 = vector.broadcast %cst_27 : f32 to vector<1x32xf32>
    %70 = arith.addf %66, %69 : vector<1x32xf32>
    %71 = math.rsqrt %70 : vector<1x32xf32>
    %72 = vector.broadcast %71 : vector<1x32xf32> to vector<8x32xf32>
    %73 = arith.mulf %68, %72 : vector<8x32xf32>
    %74 = vector.broadcast %1 : vector<1x32xf32> to vector<8x32xf32>
    %75 = arith.mulf %73, %74 : vector<8x32xf32>
    %76 = vector.broadcast %2 : vector<1x32xf32> to vector<8x32xf32>
    %77 = arith.addf %75, %76 : vector<8x32xf32>
    %cst_28 = arith.constant 0.000000e+00 : f32
    %78 = vector.broadcast %cst_28 : f32 to vector<8x32xf32>
    %79 = arith.maximumf %77, %78 : vector<8x32xf32>
    %80 = arith.truncf %79 : vector<8x32xf32> to vector<8x32xbf16>
    %cst_29 = arith.constant dense<0.000000e+00> : vector<8x32xf32>
    %81 = tpu.matmul %80, %7, %cst_29 {dimension_numbers = #tpu.dot_dimension_numbers<[1], [0], [0], [1], [0, 0, 1, 1], [], []>} : vector<8x32xbf16>, vector<32x32xbf16>, vector<8x32xf32> -> vector<8x32xf32>
    %82 = vector.broadcast %3 : vector<1x32xf32> to vector<8x32xf32>
    %83 = arith.addf %81, %82 : vector<8x32xf32>
    %84 = arith.mulf %83, %83 : vector<8x32xf32>
    %cst_30 = arith.constant dense<0.000000e+00> : vector<8xf32>
    %85 = vector.multi_reduction <add>, %84, %cst_30 [1] : vector<8x32xf32> to vector<8xf32>
    %86 = vector.shape_cast %85 : vector<8xf32> to vector<8x1xf32>
    %cst_31 = arith.constant 1.000000e-24 : f32
    %87 = vector.broadcast %cst_31 : f32 to vector<8x1xf32>
    %88 = arith.maximumf %86, %87 : vector<8x1xf32>
    %89 = math.rsqrt %88 : vector<8x1xf32>
    %cst_32 = arith.constant 1.41421354 : f32
    %90 = vector.broadcast %cst_32 : f32 to vector<8x1xf32>
    %91 = arith.mulf %89, %90 : vector<8x1xf32>
    %92 = vector.broadcast %91 : vector<8x1xf32> to vector<8x32xf32>
    %93 = arith.mulf %83, %92 : vector<8x32xf32>
    %cst_33 = arith.constant dense<0.000000e+00> : vector<8x8xf32>
    %94 = tpu.matmul %50, %50, %cst_33 {dimension_numbers = #tpu.dot_dimension_numbers<[1], [1], [0], [0], [0, 0, 1, 0], [], []>} : vector<8x32xf32>, vector<8x32xf32>, vector<8x8xf32> -> vector<8x8xf32>
    %95 = math.exp %94 : vector<8x8xf32>
    %cst_34 = arith.constant dense<0.000000e+00> : vector<8x8xf32>
    %96 = tpu.matmul %50, %93, %cst_34 {dimension_numbers = #tpu.dot_dimension_numbers<[1], [1], [0], [0], [0, 0, 1, 0], [], []>} : vector<8x32xf32>, vector<8x32xf32>, vector<8x8xf32> -> vector<8x8xf32>
    %97 = math.exp %96 : vector<8x8xf32>
    %cst_35 = arith.constant dense<0.000000e+00> : vector<8x8xf32>
    %98 = tpu.matmul %93, %50, %cst_35 {dimension_numbers = #tpu.dot_dimension_numbers<[1], [1], [0], [0], [0, 0, 1, 0], [], []>} : vector<8x32xf32>, vector<8x32xf32>, vector<8x8xf32> -> vector<8x8xf32>
    %99 = math.exp %98 : vector<8x8xf32>
    %cst_36 = arith.constant dense<0.000000e+00> : vector<8x8xf32>
    %100 = tpu.matmul %93, %93, %cst_36 {dimension_numbers = #tpu.dot_dimension_numbers<[1], [1], [0], [0], [0, 0, 1, 0], [], []>} : vector<8x32xf32>, vector<8x32xf32>, vector<8x8xf32> -> vector<8x8xf32>
    %101 = math.exp %100 : vector<8x8xf32>
    %cst_37 = arith.constant dense<0.000000e+00> : vector<8xf32>
    %102 = vector.multi_reduction <add>, %95, %cst_37 [1] : vector<8x8xf32> to vector<8xf32>
    %103 = vector.shape_cast %102 : vector<8xf32> to vector<8x1xf32>
    %cst_38 = arith.constant dense<0.000000e+00> : vector<8xf32>
    %104 = vector.multi_reduction <add>, %97, %cst_38 [1] : vector<8x8xf32> to vector<8xf32>
    %105 = vector.shape_cast %104 : vector<8xf32> to vector<8x1xf32>
    %106 = arith.addf %103, %105 : vector<8x1xf32>
    %cst_39 = arith.constant 7.3890562 : f32
    %107 = vector.broadcast %cst_39 : f32 to vector<8x1xf32>
    %108 = arith.subf %106, %107 : vector<8x1xf32>
    %cst_40 = arith.constant dense<0.000000e+00> : vector<8xf32>
    %109 = vector.multi_reduction <add>, %99, %cst_40 [1] : vector<8x8xf32> to vector<8xf32>
    %110 = vector.shape_cast %109 : vector<8xf32> to vector<8x1xf32>
    %cst_41 = arith.constant dense<0.000000e+00> : vector<8xf32>
    %111 = vector.multi_reduction <add>, %101, %cst_41 [1] : vector<8x8xf32> to vector<8xf32>
    %112 = vector.shape_cast %111 : vector<8xf32> to vector<8x1xf32>
    %113 = arith.addf %110, %112 : vector<8x1xf32>
    %cst_42 = arith.constant 7.3890562 : f32
    %114 = vector.broadcast %cst_42 : f32 to vector<8x1xf32>
    %115 = arith.subf %113, %114 : vector<8x1xf32>
    %116 = arith.mulf %50, %93 : vector<8x32xf32>
    %cst_43 = arith.constant dense<0.000000e+00> : vector<8xf32>
    %117 = vector.multi_reduction <add>, %116, %cst_43 [1] : vector<8x32xf32> to vector<8xf32>
    %118 = vector.shape_cast %117 : vector<8xf32> to vector<8x1xf32>
    %119 = math.exp %118 : vector<8x1xf32>
    %cst_44 = arith.constant 4.000000e-01 : f32
    %120 = vector.broadcast %cst_44 : f32 to vector<8x1xf32>
    %121 = arith.cmpf ole, %119, %120 : vector<8x1xf32>
    %122 = arith.extui %121 : vector<8x1xi1> to vector<8x1xi32>
    %123 = arith.sitofp %122 : vector<8x1xi32> to vector<8x1xf32>
    %cst_45 = arith.constant 4.000000e-01 : f32
    %124 = vector.broadcast %cst_45 : f32 to vector<8x1xf32>
    %125 = arith.cmpf ogt, %119, %124 : vector<8x1xf32>
    %cst_46 = arith.constant 5.000000e-01 : f32
    %126 = vector.broadcast %cst_46 : f32 to vector<8x1xf32>
    %127 = arith.cmpf olt, %119, %126 : vector<8x1xf32>
    %128 = arith.andi %125, %127 : vector<8x1xi1>
    %129 = arith.extui %128 : vector<8x1xi1> to vector<8x1xi32>
    %130 = arith.sitofp %129 : vector<8x1xi32> to vector<8x1xf32>
    %cst_47 = arith.constant 5.000000e-01 : f32
    %131 = vector.broadcast %cst_47 : f32 to vector<8x1xf32>
    %132 = arith.cmpf oge, %119, %131 : vector<8x1xf32>
    %133 = arith.extui %132 : vector<8x1xi1> to vector<8x1xi32>
    %134 = arith.sitofp %133 : vector<8x1xi32> to vector<8x1xf32>
    %cst_48 = arith.constant 1.64872122 : f32
    %135 = vector.broadcast %cst_48 : f32 to vector<8x1xf32>
    %136 = arith.mulf %130, %135 : vector<8x1xf32>
    %137 = arith.addf %123, %136 : vector<8x1xf32>
    %cst_49 = arith.constant 1.000000e+00 : f32
    %138 = vector.broadcast %cst_49 : f32 to vector<8x1xf32>
    %139 = arith.subf %138, %119 : vector<8x1xf32>
    %140 = math.exp %139 : vector<8x1xf32>
    %141 = arith.mulf %134, %140 : vector<8x1xf32>
    %142 = arith.addf %137, %141 : vector<8x1xf32>
    %143 = arith.divf %119, %108 : vector<8x1xf32>
    %144 = math.log %143 : vector<8x1xf32>
    %cst_50 = arith.constant 0.000000e+00 : f32
    %145 = vector.broadcast %cst_50 : f32 to vector<8x1xf32>
    %146 = arith.subf %145, %144 : vector<8x1xf32>
    %147 = arith.divf %119, %115 : vector<8x1xf32>
    %148 = math.log %147 : vector<8x1xf32>
    %149 = arith.subf %146, %148 : vector<8x1xf32>
    %150 = arith.mulf %142, %149 : vector<8x1xf32>
    %cst_51 = arith.constant dense<0.000000e+00> : vector<1xf32>
    %151 = vector.multi_reduction <add>, %150, %cst_51 [0] : vector<8x1xf32> to vector<1xf32>
    %152 = vector.shape_cast %151 : vector<1xf32> to vector<1x1xf32>
    %cst_52 = arith.constant 6.250000e-02 : f32
    %153 = vector.broadcast %cst_52 : f32 to vector<1x1xf32>
    %154 = arith.mulf %152, %153 : vector<1x1xf32>
    %c0_53 = arith.constant 0 : index
    %c0_54 = arith.constant 0 : index
    %155 = vector.load %arg5[%c0_53, %c0_54] : memref<1x1xf32, #tpu.memory_space<vmem>>, vector<1x1xf32>
    tpu.vector_store %arg5[%c0_53, %c0_54], %154 {strides = array<i32>} : memref<1x1xf32, #tpu.memory_space<vmem>>, vector<1x1xf32>,
    return
  }
}

</mosaic_0001>

<llo_original>
// kernel: tpu_custom_call.1
$region0: #{tpu_custom_call.1}
  #allocation0 [shape = 'u32[]', space=smem, size = 0x4, offset = 0x4, fixed_abs, tag = 'smem constant byte address 0x4 - core index']
  #allocation1 [shape = 'u32[144,128]{1,0:T(1,128)}', space=vmem, size = 0x12000, scoped, tag = 'internal scratch']
  %s0 = inlined_call_operand.hbm [shape: f32[8,32], index: 0, kind: input, shape index: {}]
  %s1 = inlined_call_operand.hbm [shape: f32[8,32], index: 1, kind: input, shape index: {}]
  %s2 = inlined_call_operand.hbm [shape: f32[32,32], index: 2, kind: input, shape index: {}]
  %s3 = inlined_call_operand.hbm [shape: f32[32,32], index: 3, kind: input, shape index: {}]
  %s4 = inlined_call_operand.vmem [shape: f32[4,32], index: 4, kind: input, shape index: {}]
  %s5 = inlined_call_operand.hbm [shape: f32[1,1], index: 5, kind: output, shape index: {}]
  %s6 = sld [smem:[#allocation0]]
  $region46: #{tpu_custom_call.1} parent=0
    _
  %s8 = ssub.s32 1, %s6
  %s9 = scalar_select 0, %s8, %s6
  $region1: #{tpu_custom_call.1} parent=0
    #allocation2 [shape = 'u8[4096]{0}', space=vmem, size = 0x1000, scoped, tag = 'input window, operand 0, single buffered']
    #allocation3 [shape = 's32[1]{0}', space=sflag, size = 0x4, scoped, tag = 'scoped memory for tpu_custom_call.1']
    #allocation4 [shape = 's32[1]{0}', space=sflag, size = 0x4, scoped, tag = 'scoped memory for tpu_custom_call.1']
    #allocation5 [shape = 'u8[4096]{0}', space=vmem, size = 0x1000, scoped, tag = 'input window, operand 1, single buffered']
    #allocation6 [shape = 's32[1]{0}', space=sflag, size = 0x4, scoped, tag = 'scoped memory for tpu_custom_call.1']
    #allocation7 [shape = 'u8[16384]{0}', space=vmem, size = 0x4000, scoped, tag = 'input window, operand 2, single buffered']
    #allocation8 [shape = 'u8[16384]{0}', space=vmem, size = 0x4000, scoped, tag = 'input window, operand 3, single buffered']
    #allocation9 [shape = 's32[1]{0}', space=sflag, size = 0x4, scoped, tag = 'scoped memory for tpu_custom_call.1']
    #allocation10 [shape = 'u8[512]{0}', space=vmem, size = 0x400, scoped, tag = 'output window, operand 0, single buffered']
    %10 = vsyncpa [#allocation3], 0
    %11 = vsyncpa [#allocation6], 0
    %12 = vsyncpa [#allocation9], 0
    %13 = vsyncpa [#allocation4], 0
    // Predicated region
    $region2: #{tpu_custom_call.1} parent=1 // pred_check
      _
    $region3: #{tpu_custom_call.1} parent=1 // pred_check_branch
      %15 = sbr.rel (0) target = $region5
    $region4: #{tpu_custom_call.1} parent=1 // pred_region
      %s17 = ssub.s32 128, 128
      %18 = vsyncadd [#allocation3], %s17
      %s20 = sshll.u32 [#allocation2], 4
      %s21 = int_to_ptr.vmem [resolvable:$true] %s20
      %23 = dma.hbm_to_vmem [thread:$0]  %s0, 128, %s21, [#allocation3]
    $region5: #{tpu_custom_call.1} parent=1 // pred_fallthru
      _
    // Predicated region
    $region6: #{tpu_custom_call.1} parent=1 // pred_check
      _
    $region7: #{tpu_custom_call.1} parent=1 // pred_check_branch
      %25 = sbr.rel (0) target = $region9
    $region8: #{tpu_custom_call.1} parent=1 // pred_region
      %s27 = ssub.s32 128, 128
      %28 = vsyncadd [#allocation6], %s27
      %s30 = sshll.u32 [#allocation5], 4
      %s31 = int_to_ptr.vmem [resolvable:$true] %s30
      %33 = dma.hbm_to_vmem [thread:$0]  %s1, 128, %s31, [#allocation6]
    $region9: #{tpu_custom_call.1} parent=1 // pred_fallthru
      _
    // Predicated region
    $region10: #{tpu_custom_call.1} parent=1 // pred_check
      _
    $region11: #{tpu_custom_call.1} parent=1 // pred_check_branch
      %35 = sbr.rel (0) target = $region13
    $region12: #{tpu_custom_call.1} parent=1 // pred_region
      %s37 = ssub.s32 512, 512
      %38 = vsyncadd [#allocation6], %s37
      %s39 = sshll.u32 [#allocation7], 4
      %s40 = int_to_ptr.vmem [resolvable:$true] %s39
      %45 = dma.hbm_to_vmem [thread:$0]  %s2, 512, %s40, [#allocation6], 128, 128, 8
    $region13: #{tpu_custom_call.1} parent=1 // pred_fallthru
      _
    // Predicated region
    $region14: #{tpu_custom_call.1} parent=1 // pred_check
      _
    $region15: #{tpu_custom_call.1} parent=1 // pred_check_branch
      %47 = sbr.rel (0) target = $region17
    $region16: #{tpu_custom_call.1} parent=1 // pred_region
      %s49 = ssub.s32 512, 512
      %50 = vsyncadd [#allocation9], %s49
      %s51 = sshll.u32 [#allocation8], 4
      %s52 = int_to_ptr.vmem [resolvable:$true] %s51
      %57 = dma.hbm_to_vmem [thread:$0]  %s3, 512, %s52, [#allocation9], 128, 128, 8
    $region17: #{tpu_custom_call.1} parent=1 // pred_fallthru
      _
    // Predicated region
    $region18: #{tpu_custom_call.1} parent=1 // pred_check
      _
    $region19: #{tpu_custom_call.1} parent=1 // pred_check_branch
      %59 = sbr.rel (0) target = $region21
    $region20: #{tpu_custom_call.1} parent=1 // pred_region
      _
    $region21: #{tpu_custom_call.1} parent=1 // pred_fallthru
      _
    // Predicated region
    $region22: #{tpu_custom_call.1} parent=1 // pred_check
      _
    $region23: #{tpu_custom_call.1} parent=1 // pred_check_branch
      %61 = sbr.rel (0) target = $region25
    $region24: #{tpu_custom_call.1} parent=1 // pred_region
      %62 = dma.done [#allocation3], 128
    $region25: #{tpu_custom_call.1} parent=1 // pred_fallthru
      _
    // Predicated region
    $region26: #{tpu_custom_call.1} parent=1 // pred_check
      _
    $region27: #{tpu_custom_call.1} parent=1 // pred_check_branch
      %64 = sbr.rel (0) target = $region29
    $region28: #{tpu_custom_call.1} parent=1 // pred_region
      %65 = dma.done [#allocation6], 128
    $region29: #{tpu_custom_call.1} parent=1 // pred_fallthru
      _
    // Predicated region
    $region30: #{tpu_custom_call.1} parent=1 // pred_check
      _
    $region31: #{tpu_custom_call.1} parent=1 // pred_check_branch
      %67 = sbr.rel (0) target = $region33
    $region32: #{tpu_custom_call.1} parent=1 // pred_region
      %68 = dma.done [#allocation6], 512
    $region33: #{tpu_custom_call.1} parent=1 // pred_fallthru
      _
    // Predicated region
    $region34: #{tpu_custom_call.1} parent=1 // pred_check
      _
    $region35: #{tpu_custom_call.1} parent=1 // pred_check_branch
      %70 = sbr.rel (0) target = $region37
    $region36: #{tpu_custom_call.1} parent=1 // pred_region
      %71 = dma.done [#allocation9], 512
    $region37: #{tpu_custom_call.1} parent=1 // pred_fallthru
      _
    %v73 = vld [vmem:[%s4] sm:$0x1]
    %v74 = vld [vmem:[%s4 + $0x1] sm:$0x1]
    %v75 = vld [vmem:[%s4 + $0x2] sm:$0x1]
    %v76 = vld [vmem:[%s4 + $0x3] sm:$0x1]
    %v77 = vld [vmem:[#allocation7] sm:$0xff]
    %v78 = vld [vmem:[#allocation7 + $0x8] sm:$0xff]
    %v79 = vld [vmem:[#allocation7 + $0x10] sm:$0xff]
    %v80 = vld [vmem:[#allocation7 + $0x18] sm:$0xff]
    %v81 = vpack.c.bf16 %v78, %v77
    %v82 = vpack.c.bf16 %v80, %v79
    %v83 = vld [vmem:[#allocation8] sm:$0xff]
    %v84 = vld [vmem:[#allocation8 + $0x8] sm:$0xff]
    %v85 = vld [vmem:[#allocation8 + $0x10] sm:$0xff]
    %v86 = vld [vmem:[#allocation8 + $0x18] sm:$0xff]
    %v87 = vpack.c.bf16 %v84, %v83
    %v88 = vpack.c.bf16 %v86, %v85
    %v89 = vld [vmem:[#allocation2] sm:$0xff]
    %v90 = vpack.c.bf16 %v89, %v89
    %v91 = vlaneseq
    %v92 = vshrl.u32 %v91, 7
    %v93 = vsub.s32 0, %v92
    %v94 = vrot.slane %v73, %v93
    %vm95 = vcmask 261120
    %v97 = vsel %vm95, %v90, 0
    %99 = vmatprep.subr.bf16.mxu0 0
    %100 = vmatpush1.bf16.msra.mxu0 %v81
    %101 = vmatprep.subr.bf16.mxu0 0
    %102 = vmatpush1.bf16.msra.mxu0 %v82
    %103 = vmatprep.subr.bf16.mxu0 0
    %104 = vmatpush1.bf16.msra.mxu0 0
    %105 = vmatprep.subr.bf16.mxu0 0
    %106 = vmatpush1.bf16.msra.mxu0 0
    %107 = vmatprep.subr.bf16.mxu0 0
    %108 = vmatpush1.bf16.msra.mxu0 0
    %109 = vmatprep.subr.bf16.mxu0 0
    %110 = vmatpush1.bf16.msra.mxu0 0
    %111 = vmatprep.subr.bf16.mxu0 0
    %112 = vmatpush1.bf16.msra.mxu0 0
    %113 = vmatprep.subr.bf16.mxu0 0
    %114 = vmatpush1.bf16.msra.mxu0 0
    %115 = vmatprep.subr.bf16.mxu0 0
    %116 = vmatpush1.bf16.msra.mxu0 0
    %117 = vmatprep.subr.bf16.mxu0 0
    %118 = vmatpush1.bf16.msra.mxu0 0
    %119 = vmatprep.subr.bf16.mxu0 0
    %120 = vmatpush1.bf16.msra.mxu0 0
    %121 = vmatprep.subr.bf16.mxu0 0
    %122 = vmatpush1.bf16.msra.mxu0 0
    %123 = vmatprep.subr.bf16.mxu0 0
    %124 = vmatpush1.bf16.msra.mxu0 0
    %125 = vmatprep.subr.bf16.mxu0 0
    %126 = vmatpush1.bf16.msra.mxu0 0
    %127 = vmatprep.subr.bf16.mxu0 0
    %128 = vmatpush1.bf16.msra.mxu0 0
    %129 = vmatprep.subr.bf16.mxu0 0
    %130 = vmatpush1.bf16.msra.mxu0 0
    %131 = vmatprep.mubr.bf16.mxu0 0
    %132 = vmatmul.mubr.bf16.gmra.mrb[0].mxu0 %v97
    %v133 = vpop.f32.mrb[0].mxu0
    %v134 = vadd.f32 %v94, %v133
    %v135 = vpop.f32.mrb[0].mxu0
    %v136 = vpop.f32.mrb[0].mxu0
    %v137 = vpop.f32.mrb[0].mxu0
    %138 = vdwg.mxu0
    %v139 = vsel %vm95, %v134, 0.0
    %v140 = vrot.slane %v139, 4
    %v141 = vadd.f32 %v139, %v140
    %v142 = vrot.slane %v141, 2
    %v143 = vadd.f32 %v141, %v142
    %v144 = vrot.slane %v143, 1
    %v145 = vadd.f32 %v143, %v144
    %v146 = vmul.f32 %v145, 0.125
    %v147 = vmul.f32 %v134, %v134
    %v148 = vsel %vm95, %v147, 0.0
    %v149 = vrot.slane %v148, 4
    %v150 = vadd.f32 %v148, %v149
    %v151 = vrot.slane %v150, 2
    %v152 = vadd.f32 %v150, %v151
    %v153 = vrot.slane %v152, 1
    %v154 = vadd.f32 %v152, %v153
    %v155 = vmul.f32 %v154, 0.125
    %v156 = vmul.f32 %v146, %v146
    %v157 = vsub.f32 %v155, %v156
    %v158 = vsub.f32 %v134, %v146
    %v159 = vadd.f32 %v157, 1e-05
    %v160 = vrsqrt.pop %v159
    %v161 = vmul.f32 %v158, %v160
    %v162 = vlaneseq
    %v163 = vshrl.u32 %v162, 7
    %v164 = vsub.s32 0, %v163
    %v165 = vrot.slane %v74, %v164
    %v166 = vmul.f32 %v161, %v165
    %v167 = vlaneseq
    %v168 = vshrl.u32 %v167, 7
    %v169 = vsub.s32 0, %v168
    %v170 = vrot.slane %v75, %v169
    %v171 = vadd.f32 %v166, %v170
    %v172 = vmax.f32 %v171, 0.0
    %v173 = vpack.c.bf16 %v172, %v172
    %v174 = vlaneseq
    %v175 = vshrl.u32 %v174, 7
    %v176 = vsub.s32 0, %v175
    %v177 = vrot.slane %v76, %v176
    %v179 = vsel %vm95, %v173, 0
    %181 = vmatprep.subr.bf16.mxu0 0
    %182 = vmatpush1.bf16.msra.mxu0 %v87
    %183 = vmatprep.subr.bf16.mxu0 0
    %184 = vmatpush1.bf16.msra.mxu0 %v88
    %185 = vmatprep.subr.bf16.mxu0 0
    %186 = vmatpush1.bf16.msra.mxu0 0
    %187 = vmatprep.subr.bf16.mxu0 0
    %188 = vmatpush1.bf16.msra.mxu0 0
    %189 = vmatprep.subr.bf16.mxu0 0
    %190 = vmatpush1.bf16.msra.mxu0 0
    %191 = vmatprep.subr.bf16.mxu0 0
    %192 = vmatpush1.bf16.msra.mxu0 0
    %193 = vmatprep.subr.bf16.mxu0 0
    %194 = vmatpush1.bf16.msra.mxu0 0
    %195 = vmatprep.subr.bf16.mxu0 0
    %196 = vmatpush1.bf16.msra.mxu0 0
    %197 = vmatprep.subr.bf16.mxu0 0
    %198 = vmatpush1.bf16.msra.mxu0 0
    %199 = vmatprep.subr.bf16.mxu0 0
    %200 = vmatpush1.bf16.msra.mxu0 0
    %201 = vmatprep.subr.bf16.mxu0 0
    %202 = vmatpush1.bf16.msra.mxu0 0
    %203 = vmatprep.subr.bf16.mxu0 0
    %204 = vmatpush1.bf16.msra.mxu0 0
    %205 = vmatprep.subr.bf16.mxu0 0
    %206 = vmatpush1.bf16.msra.mxu0 0
    %207 = vmatprep.subr.bf16.mxu0 0
    %208 = vmatpush1.bf16.msra.mxu0 0
    %209 = vmatprep.subr.bf16.mxu0 0
    %210 = vmatpush1.bf16.msra.mxu0 0
    %211 = vmatprep.subr.bf16.mxu0 0
    %212 = vmatpush1.bf16.msra.mxu0 0
    %213 = vmatprep.mubr.bf16.mxu0 0
    %214 = vmatmul.mubr.bf16.gmra.mrb[0].mxu0 %v179
    %v215 = vpop.f32.mrb[0].mxu0
    %v216 = vadd.f32 %v177, %v215
    %v217 = vpop.f32.mrb[0].mxu0
    %v218 = vpop.f32.mrb[0].mxu0
    %v219 = vpop.f32.mrb[0].mxu0
    %220 = vdwg.mxu0
    %v221 = vmul.f32 %v216, %v216
    %v222 = vsel %vm95, %v221, 0.0
    %223 = vadd.xlane.f32.xlu0 %v222
    %v224 = vpop.xlane.xlu0 %223
    %v225 = vmax.f32 %v224, 1e-24
    %v226 = vrsqrt.pop %v225
    %v227 = vmul.f32 %v226, 1.4142135
    %v228 = vmul.f32 %v216, %v227
    %v229 = vld [vmem:[#allocation5] sm:$0xff]
    %v230 = vpack.c.bf16 %v229, %v229
    %v232 = vsel %vm95, %v230, 0
    %234 = vmatprep.subr.bf16.mxu0 0
    %235 = vmatpush1.bf16.msra.mxu0 %v81
    %236 = vmatprep.subr.bf16.mxu0 0
    %237 = vmatpush1.bf16.msra.mxu0 %v82
    %238 = vmatprep.subr.bf16.mxu0 0
    %239 = vmatpush1.bf16.msra.mxu0 0
    %240 = vmatprep.subr.bf16.mxu0 0
    %241 = vmatpush1.bf16.msra.mxu0 0
    %242 = vmatprep.subr.bf16.mxu0 0
    %243 = vmatpush1.bf16.msra.mxu0 0
    %244 = vmatprep.subr.bf16.mxu0 0
    %245 = vmatpush1.bf16.msra.mxu0 0
    %246 = vmatprep.subr.bf16.mxu0 0
    %247 = vmatpush1.bf16.msra.mxu0 0
    %248 = vmatprep.subr.bf16.mxu0 0
    %249 = vmatpush1.bf16.msra.mxu0 0
    %250 = vmatprep.subr.bf16.mxu0 0
    %251 = vmatpush1.bf16.msra.mxu0 0
    %252 = vmatprep.subr.bf16.mxu0 0
    %253 = vmatpush1.bf16.msra.mxu0 0
    %254 = vmatprep.subr.bf16.mxu0 0
    %255 = vmatpush1.bf16.msra.mxu0 0
    %256 = vmatprep.subr.bf16.mxu0 0
    %257 = vmatpush1.bf16.msra.mxu0 0
    %258 = vmatprep.subr.bf16.mxu0 0
    %259 = vmatpush1.bf16.msra.mxu0 0
    %260 = vmatprep.subr.bf16.mxu0 0
    %261 = vmatpush1.bf16.msra.mxu0 0
    %262 = vmatprep.subr.bf16.mxu0 0
    %263 = vmatpush1.bf16.msra.mxu0 0
    %264 = vmatprep.subr.bf16.mxu0 0
    %265 = vmatpush1.bf16.msra.mxu0 0
    %266 = vmatprep.mubr.bf16.mxu0 0
    %267 = vmatmul.mubr.bf16.gmra.mrb[0].mxu0 %v232
    %v268 = vpop.f32.mrb[0].mxu0
    %v269 = vadd.f32 %v94, %v268
    %v270 = vpop.f32.mrb[0].mxu0
    %v271 = vpop.f32.mrb[0].mxu0
    %v272 = vpop.f32.mrb[0].mxu0
    %273 = vdwg.mxu0
    %v274 = vsel %vm95, %v269, 0.0
    %v275 = vrot.slane %v274, 4
    %v276 = vadd.f32 %v274, %v275
    %v277 = vrot.slane %v276, 2
    %v278 = vadd.f32 %v276, %v277
    %v279 = vrot.slane %v278, 1
    %v280 = vadd.f32 %v278, %v279
    %v281 = vmul.f32 %v280, 0.125
    %v282 = vmul.f32 %v269, %v269
    %v283 = vsel %vm95, %v282, 0.0
    %v284 = vrot.slane %v283, 4
    %v285 = vadd.f32 %v283, %v284
    %v286 = vrot.slane %v285, 2
    %v287 = vadd.f32 %v285, %v286
    %v288 = vrot.slane %v287, 1
    %v289 = vadd.f32 %v287, %v288
    %v290 = vmul.f32 %v289, 0.125
    %v291 = vmul.f32 %v281, %v281
    %v292 = vsub.f32 %v290, %v291
    %v293 = vsub.f32 %v269, %v281
    %v294 = vadd.f32 %v292, 1e-05
    %v295 = vrsqrt.pop %v294
    %v296 = vmul.f32 %v293, %v295
    %v297 = vmul.f32 %v296, %v165
    %v298 = vadd.f32 %v297, %v170
    %v299 = vmax.f32 %v298, 0.0
    %v300 = vpack.c.bf16 %v299, %v299
    %v302 = vsel %vm95, %v300, 0
    %304 = vmatprep.subr.bf16.mxu0 0
    %305 = vmatpush1.bf16.msra.mxu0 %v87
    %306 = vmatprep.subr.bf16.mxu0 0
    %307 = vmatpush1.bf16.msra.mxu0 %v88
    %308 = vmatprep.subr.bf16.mxu0 0
    %309 = vmatpush1.bf16.msra.mxu0 0
    %310 = vmatprep.subr.bf16.mxu0 0
    %311 = vmatpush1.bf16.msra.mxu0 0
    %312 = vmatprep.subr.bf16.mxu0 0
    %313 = vmatpush1.bf16.msra.mxu0 0
    %314 = vmatprep.subr.bf16.mxu0 0
    %315 = vmatpush1.bf16.msra.mxu0 0
    %316 = vmatprep.subr.bf16.mxu0 0
    %317 = vmatpush1.bf16.msra.mxu0 0
    %318 = vmatprep.subr.bf16.mxu0 0
    %319 = vmatpush1.bf16.msra.mxu0 0
    %320 = vmatprep.subr.bf16.mxu0 0
    %321 = vmatpush1.bf16.msra.mxu0 0
    %322 = vmatprep.subr.bf16.mxu0 0
    %323 = vmatpush1.bf16.msra.mxu0 0
    %324 = vmatprep.subr.bf16.mxu0 0
    %325 = vmatpush1.bf16.msra.mxu0 0
    %326 = vmatprep.subr.bf16.mxu0 0
    %327 = vmatpush1.bf16.msra.mxu0 0
    %328 = vmatprep.subr.bf16.mxu0 0
    %329 = vmatpush1.bf16.msra.mxu0 0
    %330 = vmatprep.subr.bf16.mxu0 0
    %331 = vmatpush1.bf16.msra.mxu0 0
    %332 = vmatprep.subr.bf16.mxu0 0
    %333 = vmatpush1.bf16.msra.mxu0 0
    %334 = vmatprep.subr.bf16.mxu0 0
    %335 = vmatpush1.bf16.msra.mxu0 0
    %336 = vmatprep.mubr.bf16.mxu0 0
    %337 = vmatmul.mubr.bf16.gmra.mrb[0].mxu0 %v302
    %v338 = vpop.f32.mrb[0].mxu0
    %v339 = vadd.f32 %v177, %v338
    %v340 = vpop.f32.mrb[0].mxu0
    %v341 = vpop.f32.mrb[0].mxu0
    %v342 = vpop.f32.mrb[0].mxu0
    %343 = vdwg.mxu0
    %v344 = vmul.f32 %v339, %v339
    %v345 = vsel %vm95, %v344, 0.0
    %346 = vadd.xlane.f32.xlu0 %v345
    %v347 = vpop.xlane.xlu0 %346
    %v348 = vmax.f32 %v347, 1e-24
    %v349 = vrsqrt.pop %v348
    %v350 = vmul.f32 %v349, 1.4142135
    %v351 = vmul.f32 %v339, %v350
    %v353 = vsel %vm95, %v228, 0
    %355 = vmatprep.subr.mxu0 0.0
    %356 = vmatpush1.xpose.msra.mxu0 %v353
    %357 = vmatprep.subr.mxu0 0.0
    %358 = vmatpush1.xpose.msra.mxu0 0.0
    %359 = vmatprep.subr.mxu0 0.0
    %360 = vmatpush1.xpose.msra.mxu0 0.0
    %361 = vmatprep.subr.mxu0 0.0
    %362 = vmatpush1.xpose.msra.mxu0 0.0
    %363 = vmatprep.subr.mxu0 0.0
    %364 = vmatpush1.xpose.msra.mxu0 0.0
    %365 = vmatprep.subr.mxu0 0.0
    %366 = vmatpush1.xpose.msra.mxu0 0.0
    %367 = vmatprep.subr.mxu0 0.0
    %368 = vmatpush1.xpose.msra.mxu0 0.0
    %369 = vmatprep.subr.mxu0 0.0
    %370 = vmatpush1.xpose.msra.mxu0 0.0
    %371 = vmatprep.subr.mxu0 0.0
    %372 = vmatpush1.xpose.msra.mxu0 0.0
    %373 = vmatprep.subr.mxu0 0.0
    %374 = vmatpush1.xpose.msra.mxu0 0.0
    %375 = vmatprep.subr.mxu0 0.0
    %376 = vmatpush1.xpose.msra.mxu0 0.0
    %377 = vmatprep.subr.mxu0 0.0
    %378 = vmatpush1.xpose.msra.mxu0 0.0
    %379 = vmatprep.subr.mxu0 0.0
    %380 = vmatpush1.xpose.msra.mxu0 0.0
    %381 = vmatprep.subr.mxu0 0.0
    %382 = vmatpush1.xpose.msra.mxu0 0.0
    %383 = vmatprep.subr.mxu0 0.0
    %384 = vmatpush1.xpose.msra.mxu0 0.0
    %385 = vmatprep.subr.mxu0 0.0
    %386 = vmatpush1.xpose.msra.mxu0 0.0
    %387 = vmatprep.subr.mxu0 0.0
    %388 = vmatpush1.xpose.msra.mxu0 0.0
    %389 = vmatprep.subr.mxu0 0.0
    %390 = vmatpush1.xpose.msra.mxu0 0.0
    %391 = vmatprep.subr.mxu0 0.0
    %392 = vmatpush1.xpose.msra.mxu0 0.0
    %393 = vmatprep.subr.mxu0 0.0
    %394 = vmatpush1.xpose.msra.mxu0 0.0
    %395 = vmatprep.subr.mxu0 0.0
    %396 = vmatpush1.xpose.msra.mxu0 0.0
    %397 = vmatprep.subr.mxu0 0.0
    %398 = vmatpush1.xpose.msra.mxu0 0.0
    %399 = vmatprep.subr.mxu0 0.0
    %400 = vmatpush1.xpose.msra.mxu0 0.0
    %401 = vmatprep.subr.mxu0 0.0
    %402 = vmatpush1.xpose.msra.mxu0 0.0
    %403 = vmatprep.subr.mxu0 0.0
    %404 = vmatpush1.xpose.msra.mxu0 0.0
    %405 = vmatprep.subr.mxu0 0.0
    %406 = vmatpush1.xpose.msra.mxu0 0.0
    %407 = vmatprep.subr.mxu0 0.0
    %408 = vmatpush1.xpose.msra.mxu0 0.0
    %409 = vmatprep.subr.mxu0 0.0
    %410 = vmatpush1.xpose.msra.mxu0 0.0
    %411 = vmatprep.subr.mxu0 0.0
    %412 = vmatpush1.xpose.msra.mxu0 0.0
    %413 = vmatprep.subr.mxu0 0.0
    %414 = vmatpush1.xpose.msra.mxu0 0.0
    %415 = vmatprep.subr.mxu0 0.0
    %416 = vmatpush1.xpose.msra.mxu0 0.0
    %417 = vmatprep.subr.mxu0 0.0
    %418 = vmatpush1.xpose.msra.mxu0 0.0
    %419 = vmatprep.mubr.f32.mxu0 0.0
    %420 = vmatmul.mubr.f32.gmra.mrb[0].mxu0 %v353
    %v421 = vpop.f32.mrb[0].mxu0
    %v422 = vadd.f32 0.0, %v421
    %v423 = vpop.f32.mrb[0].mxu0
    %424 = vdwg.mxu0
    %v425 = vmul.f32 %v422, 1.442695
    %v426 = vpow.pop %v425
    %v428 = vsel %vm95, %v351, 0
    %430 = vmatprep.subr.mxu0 0.0
    %431 = vmatpush1.xpose.msra.mxu0 %v428
    %432 = vmatprep.subr.mxu0 0.0
    %433 = vmatpush1.xpose.msra.mxu0 0.0
    %434 = vmatprep.subr.mxu0 0.0
    %435 = vmatpush1.xpose.msra.mxu0 0.0
    %436 = vmatprep.subr.mxu0 0.0
    %437 = vmatpush1.xpose.msra.mxu0 0.0
    %438 = vmatprep.subr.mxu0 0.0
    %439 = vmatpush1.xpose.msra.mxu0 0.0
    %440 = vmatprep.subr.mxu0 0.0
    %441 = vmatpush1.xpose.msra.mxu0 0.0
    %442 = vmatprep.subr.mxu0 0.0
    %443 = vmatpush1.xpose.msra.mxu0 0.0
    %444 = vmatprep.subr.mxu0 0.0
    %445 = vmatpush1.xpose.msra.mxu0 0.0
    %446 = vmatprep.subr.mxu0 0.0
    %447 = vmatpush1.xpose.msra.mxu0 0.0
    %448 = vmatprep.subr.mxu0 0.0
    %449 = vmatpush1.xpose.msra.mxu0 0.0
    %450 = vmatprep.subr.mxu0 0.0
    %451 = vmatpush1.xpose.msra.mxu0 0.0
    %452 = vmatprep.subr.mxu0 0.0
    %453 = vmatpush1.xpose.msra.mxu0 0.0
    %454 = vmatprep.subr.mxu0 0.0
    %455 = vmatpush1.xpose.msra.mxu0 0.0
    %456 = vmatprep.subr.mxu0 0.0
    %457 = vmatpush1.xpose.msra.mxu0 0.0
    %458 = vmatprep.subr.mxu0 0.0
    %459 = vmatpush1.xpose.msra.mxu0 0.0
    %460 = vmatprep.subr.mxu0 0.0
    %461 = vmatpush1.xpose.msra.mxu0 0.0
    %462 = vmatprep.subr.mxu0 0.0
    %463 = vmatpush1.xpose.msra.mxu0 0.0
    %464 = vmatprep.subr.mxu0 0.0
    %465 = vmatpush1.xpose.msra.mxu0 0.0
    %466 = vmatprep.subr.mxu0 0.0
    %467 = vmatpush1.xpose.msra.mxu0 0.0
    %468 = vmatprep.subr.mxu0 0.0
    %469 = vmatpush1.xpose.msra.mxu0 0.0
    %470 = vmatprep.subr.mxu0 0.0
    %471 = vmatpush1.xpose.msra.mxu0 0.0
    %472 = vmatprep.subr.mxu0 0.0
    %473 = vmatpush1.xpose.msra.mxu0 0.0
    %474 = vmatprep.subr.mxu0 0.0
    %475 = vmatpush1.xpose.msra.mxu0 0.0
    %476 = vmatprep.subr.mxu0 0.0
    %477 = vmatpush1.xpose.msra.mxu0 0.0
    %478 = vmatprep.subr.mxu0 0.0
    %479 = vmatpush1.xpose.msra.mxu0 0.0
    %480 = vmatprep.subr.mxu0 0.0
    %481 = vmatpush1.xpose.msra.mxu0 0.0
    %482 = vmatprep.subr.mxu0 0.0
    %483 = vmatpush1.xpose.msra.mxu0 0.0
    %484 = vmatprep.subr.mxu0 0.0
    %485 = vmatpush1.xpose.msra.mxu0 0.0
    %486 = vmatprep.subr.mxu0 0.0
    %487 = vmatpush1.xpose.msra.mxu0 0.0
    %488 = vmatprep.subr.mxu0 0.0
    %489 = vmatpush1.xpose.msra.mxu0 0.0
    %490 = vmatprep.subr.mxu0 0.0
    %491 = vmatpush1.xpose.msra.mxu0 0.0
    %492 = vmatprep.subr.mxu0 0.0
    %493 = vmatpush1.xpose.msra.mxu0 0.0
    %494 = vmatprep.mubr.f32.mxu0 0.0
    %495 = vmatmul.mubr.f32.gmra.mrb[0].mxu0 %v353
    %v496 = vpop.f32.mrb[0].mxu0
    %v497 = vadd.f32 0.0, %v496
    %v498 = vpop.f32.mrb[0].mxu0
    %499 = vdwg.mxu0
    %v500 = vmul.f32 %v497, 1.442695
    %v501 = vpow.pop %v500
    %502 = vmatprep.subr.mxu0 0.0
    %503 = vmatpush1.xpose.msra.mxu0 %v353
    %504 = vmatprep.subr.mxu0 0.0
    %505 = vmatpush1.xpose.msra.mxu0 0.0
    %506 = vmatprep.subr.mxu0 0.0
    %507 = vmatpush1.xpose.msra.mxu0 0.0
    %508 = vmatprep.subr.mxu0 0.0
    %509 = vmatpush1.xpose.msra.mxu0 0.0
    %510 = vmatprep.subr.mxu0 0.0
    %511 = vmatpush1.xpose.msra.mxu0 0.0
    %512 = vmatprep.subr.mxu0 0.0
    %513 = vmatpush1.xpose.msra.mxu0 0.0
    %514 = vmatprep.subr.mxu0 0.0
    %515 = vmatpush1.xpose.msra.mxu0 0.0
    %516 = vmatprep.subr.mxu0 0.0
    %517 = vmatpush1.xpose.msra.mxu0 0.0
    %518 = vmatprep.subr.mxu0 0.0
    %519 = vmatpush1.xpose.msra.mxu0 0.0
    %520 = vmatprep.subr.mxu0 0.0
    %521 = vmatpush1.xpose.msra.mxu0 0.0
    %522 = vmatprep.subr.mxu0 0.0
    %523 = vmatpush1.xpose.msra.mxu0 0.0
    %524 = vmatprep.subr.mxu0 0.0
    %525 = vmatpush1.xpose.msra.mxu0 0.0
    %526 = vmatprep.subr.mxu0 0.0
    %527 = vmatpush1.xpose.msra.mxu0 0.0
    %528 = vmatprep.subr.mxu0 0.0
    %529 = vmatpush1.xpose.msra.mxu0 0.0
    %530 = vmatprep.subr.mxu0 0.0
    %531 = vmatpush1.xpose.msra.mxu0 0.0
    %532 = vmatprep.subr.mxu0 0.0
    %533 = vmatpush1.xpose.msra.mxu0 0.0
    %534 = vmatprep.subr.mxu0 0.0
    %535 = vmatpush1.xpose.msra.mxu0 0.0
    %536 = vmatprep.subr.mxu0 0.0
    %537 = vmatpush1.xpose.msra.mxu0 0.0
    %538 = vmatprep.subr.mxu0 0.0
    %539 = vmatpush1.xpose.msra.mxu0 0.0
    %540 = vmatprep.subr.mxu0 0.0
    %541 = vmatpush1.xpose.msra.mxu0 0.0
    %542 = vmatprep.subr.mxu0 0.0
    %543 = vmatpush1.xpose.msra.mxu0 0.0
    %544 = vmatprep.subr.mxu0 0.0
    %545 = vmatpush1.xpose.msra.mxu0 0.0
    %546 = vmatprep.subr.mxu0 0.0
    %547 = vmatpush1.xpose.msra.mxu0 0.0
    %548 = vmatprep.subr.mxu0 0.0
    %549 = vmatpush1.xpose.msra.mxu0 0.0
    %550 = vmatprep.subr.mxu0 0.0
    %551 = vmatpush1.xpose.msra.mxu0 0.0
    %552 = vmatprep.subr.mxu0 0.0
    %553 = vmatpush1.xpose.msra.mxu0 0.0
    %554 = vmatprep.subr.mxu0 0.0
    %555 = vmatpush1.xpose.msra.mxu0 0.0
    %556 = vmatprep.subr.mxu0 0.0
    %557 = vmatpush1.xpose.msra.mxu0 0.0
    %558 = vmatprep.subr.mxu0 0.0
    %559 = vmatpush1.xpose.msra.mxu0 0.0
    %560 = vmatprep.subr.mxu0 0.0
    %561 = vmatpush1.xpose.msra.mxu0 0.0
    %562 = vmatprep.subr.mxu0 0.0
    %563 = vmatpush1.xpose.msra.mxu0 0.0
    %564 = vmatprep.subr.mxu0 0.0
    %565 = vmatpush1.xpose.msra.mxu0 0.0
    %566 = vmatprep.mubr.f32.mxu0 0.0
    %567 = vmatmul.mubr.f32.gmra.mrb[0].mxu0 %v428
    %v568 = vpop.f32.mrb[0].mxu0
    %v569 = vadd.f32 0.0, %v568
    %v570 = vpop.f32.mrb[0].mxu0
    %571 = vdwg.mxu0
    %v572 = vmul.f32 %v569, 1.442695
    %v573 = vpow.pop %v572
    %574 = vmatprep.subr.mxu0 0.0
    %575 = vmatpush1.xpose.msra.mxu0 %v428
    %576 = vmatprep.subr.mxu0 0.0
    %577 = vmatpush1.xpose.msra.mxu0 0.0
    %578 = vmatprep.subr.mxu0 0.0
    %579 = vmatpush1.xpose.msra.mxu0 0.0
    %580 = vmatprep.subr.mxu0 0.0
    %581 = vmatpush1.xpose.msra.mxu0 0.0
    %582 = vmatprep.subr.mxu0 0.0
    %583 = vmatpush1.xpose.msra.mxu0 0.0
    %584 = vmatprep.subr.mxu0 0.0
    %585 = vmatpush1.xpose.msra.mxu0 0.0
    %586 = vmatprep.subr.mxu0 0.0
    %587 = vmatpush1.xpose.msra.mxu0 0.0
    %588 = vmatprep.subr.mxu0 0.0
    %589 = vmatpush1.xpose.msra.mxu0 0.0
    %590 = vmatprep.subr.mxu0 0.0
    %591 = vmatpush1.xpose.msra.mxu0 0.0
    %592 = vmatprep.subr.mxu0 0.0
    %593 = vmatpush1.xpose.msra.mxu0 0.0
    %594 = vmatprep.subr.mxu0 0.0
    %595 = vmatpush1.xpose.msra.mxu0 0.0
    %596 = vmatprep.subr.mxu0 0.0
    %597 = vmatpush1.xpose.msra.mxu0 0.0
    %598 = vmatprep.subr.mxu0 0.0
    %599 = vmatpush1.xpose.msra.mxu0 0.0
    %600 = vmatprep.subr.mxu0 0.0
    %601 = vmatpush1.xpose.msra.mxu0 0.0
    %602 = vmatprep.subr.mxu0 0.0
    %603 = vmatpush1.xpose.msra.mxu0 0.0
    %604 = vmatprep.subr.mxu0 0.0
    %605 = vmatpush1.xpose.msra.mxu0 0.0
    %606 = vmatprep.subr.mxu0 0.0
    %607 = vmatpush1.xpose.msra.mxu0 0.0
    %608 = vmatprep.subr.mxu0 0.0
    %609 = vmatpush1.xpose.msra.mxu0 0.0
    %610 = vmatprep.subr.mxu0 0.0
    %611 = vmatpush1.xpose.msra.mxu0 0.0
    %612 = vmatprep.subr.mxu0 0.0
    %613 = vmatpush1.xpose.msra.mxu0 0.0
    %614 = vmatprep.subr.mxu0 0.0
    %615 = vmatpush1.xpose.msra.mxu0 0.0
    %616 = vmatprep.subr.mxu0 0.0
    %617 = vmatpush1.xpose.msra.mxu0 0.0
    %618 = vmatprep.subr.mxu0 0.0
    %619 = vmatpush1.xpose.msra.mxu0 0.0
    %620 = vmatprep.subr.mxu0 0.0
    %621 = vmatpush1.xpose.msra.mxu0 0.0
    %622 = vmatprep.subr.mxu0 0.0
    %623 = vmatpush1.xpose.msra.mxu0 0.0
    %624 = vmatprep.subr.mxu0 0.0
    %625 = vmatpush1.xpose.msra.mxu0 0.0
    %626 = vmatprep.subr.mxu0 0.0
    %627 = vmatpush1.xpose.msra.mxu0 0.0
    %628 = vmatprep.subr.mxu0 0.0
    %629 = vmatpush1.xpose.msra.mxu0 0.0
    %630 = vmatprep.subr.mxu0 0.0
    %631 = vmatpush1.xpose.msra.mxu0 0.0
    %632 = vmatprep.subr.mxu0 0.0
    %633 = vmatpush1.xpose.msra.mxu0 0.0
    %634 = vmatprep.subr.mxu0 0.0
    %635 = vmatpush1.xpose.msra.mxu0 0.0
    %636 = vmatprep.subr.mxu0 0.0
    %637 = vmatpush1.xpose.msra.mxu0 0.0
    %638 = vmatprep.mubr.f32.mxu0 0.0
    %639 = vmatmul.mubr.f32.gmra.mrb[0].mxu0 %v428
    %v640 = vpop.f32.mrb[0].mxu0
    %v641 = vadd.f32 0.0, %v640
    %v642 = vpop.f32.mrb[0].mxu0
    %643 = vdwg.mxu0
    %v644 = vmul.f32 %v641, 1.442695
    %v645 = vpow.pop %v644
    %vm646 = vcmask 64512
    %v647 = vsel %vm646, %v426, 0.0
    %648 = vadd.xlane.f32.xlu0 %v647
    %v649 = vpop.xlane.xlu0 %648
    %v650 = vsel %vm646, %v501, 0.0
    %651 = vadd.xlane.f32.xlu0 %v650
    %v652 = vpop.xlane.xlu0 %651
    %v653 = vadd.f32 %v649, %v652
    %v654 = vsub.f32 %v653, 7.389056
    %v655 = vsel %vm646, %v573, 0.0
    %656 = vadd.xlane.f32.xlu0 %v655
    %v657 = vpop.xlane.xlu0 %656
    %v658 = vsel %vm646, %v645, 0.0
    %659 = vadd.xlane.f32.xlu0 %v658
    %v660 = vpop.xlane.xlu0 %659
    %v661 = vadd.f32 %v657, %v660
    %v662 = vsub.f32 %v661, 7.389056
    %v663 = vmul.f32 %v228, %v351
    %v664 = vsel %vm95, %v663, 0.0
    %665 = vadd.xlane.f32.xlu0 %v664
    %v666 = vpop.xlane.xlu0 %665
    %v667 = vmul.f32 %v666, 1.442695
    %v668 = vpow.pop %v667
    %vm669 = vcmp.le.f32.partialorder %v668, 0.4
    %v670 = vsel %vm669, 1, 0
    %v671 = vcvt.s32.f32 %v670
    %vm672 = vcmp.gt.f32.partialorder %v668, 0.4
    %vm673 = vcmp.lt.f32.partialorder %v668, 0.5
    %vm674 = vmand %vm672, %vm673
    %v675 = vsel %vm674, 1, 0
    %v676 = vcvt.s32.f32 %v675
    %vm677 = vcmp.ge.f32.partialorder %v668, 0.5
    %v678 = vsel %vm677, 1, 0
    %v679 = vcvt.s32.f32 %v678
    %v680 = vmul.f32 %v676, 1.6487212
    %v681 = vadd.f32 %v671, %v680
    %v682 = vsub.f32 1.0, %v668
    %v683 = vmul.f32 %v682, 1.442695
    %v684 = vpow.pop %v683
    %v685 = vmul.f32 %v679, %v684
    %v686 = vadd.f32 %v681, %v685
    %v687 = vrcp.pop %v654
    %v688 = vmul.f32 %v668, %v687
    %v689 = vlog2.pop %v688
    %v690 = vmul.f32 %v689, 0.6931472
    %v691 = vsub.f32 0.0, %v690
    %v692 = vrcp.pop %v662
    %v693 = vmul.f32 %v668, %v692
    %v694 = vlog2.pop %v693
    %v695 = vmul.f32 %v694, 0.6931472
    %v696 = vsub.f32 %v691, %v695
    %v697 = vmul.f32 %v686, %v696
    %v698 = vrot.slane %v697, 4
    %v699 = vadd.f32 %v697, %v698
    %v700 = vrot.slane %v699, 2
    %v701 = vadd.f32 %v699, %v700
    %v702 = vrot.slane %v701, 1
    %v703 = vadd.f32 %v701, %v702
    %v704 = vmul.f32 %v703, 0.0625
    %vm705 = vcmask 0
    %706 = vst.msk [vmem:[#allocation10] sm:$0x1] %vm705, %v704
    // Predicated region
    $region38: #{tpu_custom_call.1} parent=1 // pred_check
      _
    $region39: #{tpu_custom_call.1} parent=1 // pred_check_branch
      %708 = sbr.rel (0) target = $region41
    $region40: #{tpu_custom_call.1} parent=1 // pred_region
      %s710 = ssub.s32 16, 16
      %711 = vsyncadd [#allocation4], %s710
      %s713 = sshll.u32 [#allocation10], 4
      %s714 = int_to_ptr.vmem [resolvable:$true] %s713
      %716 = dma.vmem_to_hbm [thread:$0]  %s714, 16, %s5, [#allocation4]
    $region41: #{tpu_custom_call.1} parent=1 // pred_fallthru
      _
    // Predicated region
    $region42: #{tpu_custom_call.1} parent=1 // pred_check
      _
    $region43: #{tpu_custom_call.1} parent=1 // pred_check_branch
      %718 = sbr.rel (0) target = $region45
    $region44: #{tpu_custom_call.1} parent=1 // pred_region
      %719 = dma.done [#allocation4], 16
    $region45: #{tpu_custom_call.1} parent=1 // pred_fallthru
      _
    %720 = vsyncpa [#allocation3], 1
    %721 = vsyncpa [#allocation6], 1
    %722 = vsyncpa [#allocation9], 1
    %723 = vsyncpa [#allocation4], 1

</llo_original>
